<compile_context>
chip_gen: v5e
topology: v5e:2x2
jax: 0.10.0
libtpu: 0.0.40
codegen_flags: <defaults>
</compile_context>

<pallas_src>
import functools

import jax
import jax.numpy as jnp
from jax.experimental import pallas as pl
from jax.experimental.pallas import tpu as pltpu


def _round_up(x, m):
    return ((x + m - 1) // m) * m


def _gated_dense_kernel(x_ref, w_ref, b_ref, o_ref, acc_ref, *, activation, tn):
    """One output tile. w_ref holds the fused [Wh_j | Wg_j] block of width 2*tn."""
    k = pl.program_id(2)

    @pl.when(k == 0)
    def _():
        acc_ref[...] = jnp.zeros_like(acc_ref)

    # Single MXU pass over the fused weight block (bf16 inputs, f32 accumulation).
    acc_ref[...] += jnp.dot(x_ref[...], w_ref[...],
                            preferred_element_type=jnp.float32)

    @pl.when(k == pl.num_programs(2) - 1)
    def _():
        hg = acc_ref[...] + b_ref[...].astype(jnp.float32)   # (tm, 2*tn), f32 epilogue
        h = hg[:, :tn]
        g = hg[:, tn:]
        if activation is not None:
            h = activation(h)
        o_ref[...] = (h * jax.nn.sigmoid(g)).astype(o_ref.dtype)


def gated_dense(x, wh, bh, wg, bg, *, activation=None,
                tm=256, tn=256, tk=512, compute_dtype=jnp.bfloat16):
    """GatedDense forward: out = act(x @ Wh + bh) * sigmoid(x @ Wg + bg).

    x: (M, K); wh, wg: (K, N); bh, bg: (1, N) -> (M, N).
    """
    M, K = x.shape
    Kw, N = wh.shape
    assert Kw == K and wg.shape == (K, N)
    out_dtype = x.dtype

    # Effective tile sizes: clamp to (8,128)-aligned problem size so small problems
    # don't over-pad, while large problems get full MXU-sized tiles.
    tm_e = min(tm, _round_up(M, 8))
    tn_e = min(tn, _round_up(N, 128))
    tk_e = min(tk, _round_up(K, 128))

    M_p = _round_up(M, tm_e)
    N_p = _round_up(N, tn_e)
    K_p = _round_up(K, tk_e)

    # Pad inputs (zero-padding K is exact; padded M rows / N cols are sliced off).
    x_p = jnp.pad(x, ((0, M_p - M), (0, K_p - K))).astype(compute_dtype)

    def pad_w(w):
        return jnp.pad(w, ((0, K_p - K), (0, N_p - N)))

    def pad_b(b):
        return jnp.pad(b.reshape(1, N), ((0, 0), (0, N_p - N)))

    nb = N_p // tn_e
    # Interleave Wh / Wg in blocks of tn so every N-tile's weight block is [Wh_j | Wg_j]:
    # one fused matmul per grid step yields both the h and g halves of that output tile.
    w_fused = jnp.concatenate(
        [pad_w(wh).reshape(K_p, nb, tn_e), pad_w(wg).reshape(K_p, nb, tn_e)],
        axis=-1,
    ).reshape(K_p, 2 * N_p).astype(compute_dtype)
    b_fused = jnp.concatenate(
        [pad_b(bh).reshape(1, nb, tn_e), pad_b(bg).reshape(1, nb, tn_e)],
        axis=-1,
    ).reshape(1, 2 * N_p).astype(jnp.float32)

    kernel = functools.partial(_gated_dense_kernel, activation=activation, tn=tn_e)

    out_p = pl.pallas_call(
        kernel,
        out_shape=jax.ShapeDtypeStruct((M_p, N_p), out_dtype),
        grid_spec=pltpu.PrefetchScalarGridSpec(
            num_scalar_prefetch=0,
            grid=(M_p // tm_e, N_p // tn_e, K_p // tk_e),
            in_specs=[
                pl.BlockSpec((tm_e, tk_e), lambda i, j, k: (i, k)),       # x row/K tile
                pl.BlockSpec((tk_e, 2 * tn_e), lambda i, j, k: (k, j)),   # [Wh_j | Wg_j]
                pl.BlockSpec((1, 2 * tn_e), lambda i, j, k: (0, j)),      # [bh_j | bg_j]
            ],
            out_specs=pl.BlockSpec((tm_e, tn_e), lambda i, j, k: (i, j)),
            scratch_shapes=[pltpu.VMEM((tm_e, 2 * tn_e), jnp.float32)],   # f32 accumulator
        ),
        compiler_params=pltpu.CompilerParams(
            dimension_semantics=("parallel", "parallel", "arbitrary"),
            vmem_limit_bytes=48 * 1024 * 1024,
        ),
    )(x_p, w_fused, b_fused)

    return out_p[:M, :N]


def init_linear_params(key, input_size, output_size, dtype=jnp.float32):
    """Deterministic init mimicking nn.Linear's uniform(-1/sqrt(in), 1/sqrt(in))."""
    kw, kb = jax.random.split(key)
    bound = 1.0 / jnp.sqrt(jnp.array(input_size, dtype))
    # Stored already transposed: (input_size, output_size).
    w = jax.random.uniform(kw, (input_size, output_size), dtype, -bound, bound)
    b = jax.random.uniform(kb, (1, output_size), dtype, -bound, bound)
    return w, b


if __name__ == "__main__":
    key = jax.random.PRNGKey(0)
    k_x, k_h, k_g = jax.random.split(key, 3)

    # Small shapes, but deliberately non-tile-aligned; with the small tiles below the
    # grid becomes (2, 2, 2) so padding, N-tiled bias indexing, the interleaved weight
    # fusion and the K-reduction accumulator all get exercised.
    batch, input_size, output_size = 24, 160, 192
    x = jax.random.normal(k_x, (batch, input_size), jnp.float32)
    wh, bh = init_linear_params(k_h, input_size, output_size)
    wg, bg = init_linear_params(k_g, input_size, output_size)

    # activation=None matches GatedDense's default constructor argument.
    out = gated_dense(x, wh, bh, wg, bg, activation=None, tm=16, tn=128, tk=128)
    out = jax.block_until_ready(out)

    # Pure-JAX f32 reference; kernel uses bf16 MXU inputs with f32 accumulation,
    # so compare with a bf16-appropriate tolerance.
    h_ref = x @ wh + bh
    g_ref = jax.nn.sigmoid(x @ wg + bg)
    ref = h_ref * g_ref
    assert out.shape == (batch, output_size)
    assert jnp.allclose(out, ref, atol=5e-2, rtol=5e-2), "mismatch vs reference"

    print("KERNEL_OK")
</pallas_src>

<mosaic_0001>
module attributes {stable_mosaic.version = 11 : i64} {
  func.func @_gated_dense_kernel(%arg0: i32, %arg1: i32, %arg2: i32, %arg3: memref<16x128xbf16, #tpu.memory_space<vmem>>, %arg4: memref<128x256xbf16, #tpu.memory_space<vmem>>, %arg5: memref<1x256xf32, #tpu.memory_space<vmem>>, %arg6: memref<16x128xf32, #tpu.memory_space<vmem>>, %arg7: memref<16x256xf32, #tpu.memory_space<vmem>>) attributes {dimension_semantics = [#tpu.dimension_semantics<parallel>, #tpu.dimension_semantics<parallel>, #tpu.dimension_semantics<arbitrary>], iteration_bounds = array<i64: 2, 2, 2>, scalar_prefetch = 0 : i64, scratch_operands = 1 : i64, tpu.core_type = #tpu.core_type<tc>, window_params = [{transform_indices = @transform_0, window_bounds = array<i64: 16, 128>}, {transform_indices = @transform_1, window_bounds = array<i64: 128, 256>}, {transform_indices = @transform_2, window_bounds = array<i64: 1, 256>}, {transform_indices = @transform_3, window_bounds = array<i64: 16, 128>}]} {
    %c0_i32 = arith.constant 0 : i32
    %0 = arith.cmpi eq, %arg2, %c0_i32 : i32
    %1 = arith.extui %0 : i1 to i32
    %c0_i32_0 = arith.constant 0 : i32
    %2 = arith.cmpi ne, %1, %c0_i32_0 : i32
    scf.if %2 {
      %cst_9 = arith.constant 0.000000e+00 : f32
      %12 = vector.broadcast %cst_9 : f32 to vector<16x256xf32>
      %c0_10 = arith.constant 0 : index
      %c0_11 = arith.constant 0 : index
      %13 = vector.load %arg7[%c0_10, %c0_11] : memref<16x256xf32, #tpu.memory_space<vmem>>, vector<16x256xf32>
      tpu.vector_store %arg7[%c0_10, %c0_11], %12 {strides = array<i32>} : memref<16x256xf32, #tpu.memory_space<vmem>>, vector<16x256xf32>,
    } else {
    }
    %c0 = arith.constant 0 : index
    %c0_1 = arith.constant 0 : index
    %3 = vector.load %arg7[%c0, %c0_1] : memref<16x256xf32, #tpu.memory_space<vmem>>, vector<16x256xf32>
    %c0_2 = arith.constant 0 : index
    %c0_3 = arith.constant 0 : index
    %4 = vector.load %arg3[%c0_2, %c0_3] : memref<16x128xbf16, #tpu.memory_space<vmem>>, vector<16x128xbf16>
    %c0_4 = arith.constant 0 : index
    %c0_5 = arith.constant 0 : index
    %5 = vector.load %arg4[%c0_4, %c0_5] : memref<128x256xbf16, #tpu.memory_space<vmem>>, vector<128x256xbf16>
    %cst = arith.constant dense<0.000000e+00> : vector<16x256xf32>
    %6 = tpu.matmul %4, %5, %cst {dimension_numbers = #tpu.dot_dimension_numbers<[1], [0], [0], [1], [0, 0, 1, 1], [], []>} : vector<16x128xbf16>, vector<128x256xbf16>, vector<16x256xf32> -> vector<16x256xf32>
    %7 = arith.addf %3, %6 : vector<16x256xf32>
    %c0_6 = arith.constant 0 : index
    %c0_7 = arith.constant 0 : index
    %8 = vector.load %arg7[%c0_6, %c0_7] : memref<16x256xf32, #tpu.memory_space<vmem>>, vector<16x256xf32>
    tpu.vector_store %arg7[%c0_6, %c0_7], %7 {strides = array<i32>} : memref<16x256xf32, #tpu.memory_space<vmem>>, vector<16x256xf32>,
    %c1_i32 = arith.constant 1 : i32
    %9 = arith.cmpi eq, %arg2, %c1_i32 : i32
    %10 = arith.extui %9 : i1 to i32
    %c0_i32_8 = arith.constant 0 : i32
    %11 = arith.cmpi ne, %10, %c0_i32_8 : i32
    scf.if %11 {
      %c0_9 = arith.constant 0 : index
      %c0_10 = arith.constant 0 : index
      %12 = vector.load %arg7[%c0_9, %c0_10] : memref<16x256xf32, #tpu.memory_space<vmem>>, vector<16x256xf32>
      %c0_11 = arith.constant 0 : index
      %c0_12 = arith.constant 0 : index
      %13 = vector.load %arg5[%c0_11, %c0_12] : memref<1x256xf32, #tpu.memory_space<vmem>>, vector<1x256xf32>
      %14 = vector.broadcast %13 : vector<1x256xf32> to vector<16x256xf32>
      %15 = arith.addf %12, %14 : vector<16x256xf32>
      %16 = vector.extract_strided_slice %15 {offsets = [0, 0], sizes = [16, 128], strides = [1, 1]} : vector<16x256xf32> to vector<16x128xf32>
      %17 = vector.extract_strided_slice %15 {offsets = [0, 128], sizes = [16, 128], strides = [1, 1]} : vector<16x256xf32> to vector<16x128xf32>
      %18 = arith.negf %17 : vector<16x128xf32>
      %19 = math.exp %18 : vector<16x128xf32>
      %cst_13 = arith.constant 1.000000e+00 : f32
      %20 = vector.broadcast %cst_13 : f32 to vector<16x128xf32>
      %21 = arith.addf %20, %19 : vector<16x128xf32>
      %22 = arith.divf %20, %21 : vector<16x128xf32>
      %23 = arith.mulf %16, %22 : vector<16x128xf32>
      %c0_14 = arith.constant 0 : index
      %c0_15 = arith.constant 0 : index
      %24 = vector.load %arg6[%c0_14, %c0_15] : memref<16x128xf32, #tpu.memory_space<vmem>>, vector<16x128xf32>
      tpu.vector_store %arg6[%c0_14, %c0_15], %23 {strides = array<i32>} : memref<16x128xf32, #tpu.memory_space<vmem>>, vector<16x128xf32>,
    } else {
    }
    return
  }
  func.func @transform_0(%arg0: i32, %arg1: i32, %arg2: i32) -> (i32, i32) {
    %c0_i32 = arith.constant 0 : i32
    return %arg0, %arg2 : i32, i32
  }
  func.func @transform_1(%arg0: i32, %arg1: i32, %arg2: i32) -> (i32, i32) {
    %c0_i32 = arith.constant 0 : i32
    return %arg2, %arg1 : i32, i32
  }
  func.func @transform_2(%arg0: i32, %arg1: i32, %arg2: i32) -> (i32, i32) {
    %c0_i32 = arith.constant 0 : i32
    %c0_i32_0 = arith.constant 0 : i32
    return %c0_i32, %arg1 : i32, i32
  }
  func.func @transform_3(%arg0: i32, %arg1: i32, %arg2: i32) -> (i32, i32) {
    %c0_i32 = arith.constant 0 : i32
    return %arg0, %arg1 : i32, i32
  }
}

</mosaic_0001>

<llo_original>
// kernel: tpu_custom_call.1
$region0: #{tpu_custom_call.1}
  #allocation0 [shape = 'u32[]', space=smem, size = 0x4, offset = 0x4, fixed_abs, tag = 'smem constant byte address 0x4 - core index']
  #allocation1 [shape = 'u32[72,128]{1,0:T(1,128)}', space=vmem, size = 0x9000, scoped, tag = 'internal scratch']
  #allocation2 [shape = 'f32[16,256]{1,0:T(8,128)}', space=vmem, size = 0x4000, scoped, tag = 'scratch operand']
  %s0 = inlined_call_operand.hbm [shape: bf16[32,256], index: 0, kind: input, shape index: {}]
  %s1 = inlined_call_operand.hbm [shape: bf16[256,512], index: 1, kind: input, shape index: {}]
  %s2 = inlined_call_operand.hbm [shape: f32[1,512], index: 2, kind: input, shape index: {}]
  %s3 = inlined_call_operand.hbm [shape: f32[32,256], index: 3, kind: output, shape index: {}]
  %s4 = sld [smem:[#allocation0]]
  $region65: #{tpu_custom_call.1} parent=0
    _
  %s6 = ssub.s32 1, %s4
  %s7 = scalar_select 0, %s6, %s4
  $region1: #{tpu_custom_call.1} parent=0
    #allocation3 [shape = 'u8[8192]{0}', space=vmem, size = 0x2000, scoped, tag = 'input window, operand 0']
    #allocation4 [shape = 's32[2]{0}', space=sflag, size = 0x8, scoped, tag = 'scoped memory for tpu_custom_call.1']
    #allocation5 [shape = 's32[2]{0}', space=sflag, size = 0x8, scoped, tag = 'scoped memory for tpu_custom_call.1']
    #allocation6 [shape = 'u8[131072]{0}', space=vmem, size = 0x20000, scoped, tag = 'input window, operand 1']
    #allocation7 [shape = 's32[2]{0}', space=sflag, size = 0x8, scoped, tag = 'scoped memory for tpu_custom_call.1']
    #allocation8 [shape = 'u8[2048]{0}', space=vmem, size = 0x800, scoped, tag = 'input window, operand 2']
    #allocation9 [shape = 'u8[16384]{0}', space=vmem, size = 0x4000, scoped, tag = 'output window, operand 0']
    %8 = vsyncpa [#allocation4], 0
    %s9 = scalar_lea.sflag [#allocation4], 1
    %10 = vsyncpa %s9, 0
    %11 = vsyncpa [#allocation7], 0
    %s12 = scalar_lea.sflag [#allocation7], 1
    %13 = vsyncpa %s12, 0
    %14 = vsyncpa [#allocation5], 0
    %s15 = scalar_lea.sflag [#allocation5], 1
    %16 = vsyncpa %s15, 0
    loop: start=0, step=1, limit=10
    $region2: #{tpu_custom_call.1} parent=1 // loop_pre_header
      _
    $region3: #{tpu_custom_call.1} parent=1 // loop_header
      %s18 = sphi 0, %s22
      %p19 = scmp.ge.s32.totalorder %s18, 10
      %s25 = sphi 0, %s44
      %s26 = sphi 0, %s40
      %s27 = sphi 0, %s36
      %s28 = sphi 0, %s25
      %s29 = sphi 0, %s26
      %s30 = sphi 0, %s27
      %s31 = sphi 0, %s28
      %s32 = sphi 0, %s29
      %s33 = sphi 0, %s30
      %s49 = sphi 0, %s51
      %s52 = sphi 0, %s49
      %s53 = sphi 0, %s52
      %s69 = sphi 0, %s53
      %s77 = sphi 0, %s79
      %s80 = sphi 0, %s77
      %s81 = sphi 0, %s80
      %s97 = sphi 0, %s81
      %s103 = sphi 0, %s105
      %s106 = sphi 0, %s103
      %s107 = sphi 0, %s106
      %s123 = sphi 0, %s107
      %s131 = sphi 0, %s133
      %s134 = sphi 0, %s131
      %s135 = sphi 0, %s134
      %s151 = sphi 0, %s135
    $region4: #{tpu_custom_call.1} parent=1 // loop_header_branch
      %21 = sbr.rel (%p19) target = $region8
    $region5: #{tpu_custom_call.1} parent=1 // loop_body
      %s23 = ssub.s32 %s18, 1
      %s24 = ssub.s32 %s18, 2
      %s34 = sadd.s32 1, %s27
      %p35 = scmp.ge.s32.totalorder %s34, 2
      %s36 = scalar_select %p35, 0, %s34
      %s37 = sadd.s32 1, %s26
      %s38 = scalar_select %p35, %s37, %s26
      %p39 = scmp.ge.s32.totalorder %s38, 2
      %s40 = scalar_select %p39, 0, %s38
      %s41 = sadd.s32 1, %s25
      %s42 = scalar_select %p39, %s41, %s25
      %p43 = scmp.ge.s32.totalorder %s42, 2
      %s44 = scalar_select %p43, 0, %s42
      %s45 = ssub.s32 %s25, %s44
      %s46 = ssub.s32 %s27, %s36
      %s47 = sor.u32 %s45, %s46
      %p48 = scmp.eq.s32.totalorder %s47, 0
      %s50 = sadd.s32 %s49, 1
      %s51 = scalar_select %p48, %s49, %s50
      %p54 = pneg %p48
      %p55 = scmp.eq.s32.totalorder %s18, 7
      %p56 = por %p54, %p55
      %p57 = scmp.ne.s32.totalorder %s49, %s52
      %p58 = scmp.eq.s32.totalorder %s18, 0
      %p59 = por %p57, %p58
      %p60 = scmp.ne.s32.totalorder %s49, %s52
      %p61 = scmp.eq.s32.totalorder %s23, 7
      %p62 = por %p60, %p61
      %p63 = scmp.ne.s32.totalorder %s52, %s53
      %p64 = scmp.eq.s32.totalorder %s23, 0
      %p65 = por %p63, %p64
      %p66 = scmp.ne.s32.totalorder %s52, %s53
      %p67 = scmp.eq.s32.totalorder %s24, 7
      %p68 = por %p66, %p67
      %p70 = scmp.ne.s32.totalorder %s53, %s69
      %p71 = scmp.eq.s32.totalorder %s24, 0
      %p72 = por %p70, %p71
      %s73 = ssub.s32 %s27, %s36
      %s74 = ssub.s32 %s26, %s40
      %s75 = sor.u32 %s73, %s74
      %p76 = scmp.eq.s32.totalorder %s75, 0
      %s78 = sadd.s32 %s77, 1
      %s79 = scalar_select %p76, %s77, %s78
      %p82 = pneg %p76
      %p83 = scmp.eq.s32.totalorder %s18, 7
      %p84 = por %p82, %p83
      %p85 = scmp.ne.s32.totalorder %s77, %s80
      %p86 = scmp.eq.s32.totalorder %s18, 0
      %p87 = por %p85, %p86
      %p88 = scmp.ne.s32.totalorder %s77, %s80
      %p89 = scmp.eq.s32.totalorder %s23, 7
      %p90 = por %p88, %p89
      %p91 = scmp.ne.s32.totalorder %s80, %s81
      %p92 = scmp.eq.s32.totalorder %s23, 0
      %p93 = por %p91, %p92
      %p94 = scmp.ne.s32.totalorder %s80, %s81
      %p95 = scmp.eq.s32.totalorder %s24, 7
      %p96 = por %p94, %p95
      %p98 = scmp.ne.s32.totalorder %s81, %s97
      %p99 = scmp.eq.s32.totalorder %s24, 0
      %p100 = por %p98, %p99
      %s101 = ssub.s32 %s26, %s40
      %p102 = scmp.eq.s32.totalorder %s101, 0
      %s104 = sadd.s32 %s103, 1
      %s105 = scalar_select %p102, %s103, %s104
      %p108 = pneg %p102
      %p109 = scmp.eq.s32.totalorder %s18, 7
      %p110 = por %p108, %p109
      %p111 = scmp.ne.s32.totalorder %s103, %s106
      %p112 = scmp.eq.s32.totalorder %s18, 0
      %p113 = por %p111, %p112
      %p114 = scmp.ne.s32.totalorder %s103, %s106
      %p115 = scmp.eq.s32.totalorder %s23, 7
      %p116 = por %p114, %p115
      %p117 = scmp.ne.s32.totalorder %s106, %s107
      %p118 = scmp.eq.s32.totalorder %s23, 0
      %p119 = por %p117, %p118
      %p120 = scmp.ne.s32.totalorder %s106, %s107
      %p121 = scmp.eq.s32.totalorder %s24, 7
      %p122 = por %p120, %p121
      %p124 = scmp.ne.s32.totalorder %s107, %s123
      %p125 = scmp.eq.s32.totalorder %s24, 0
      %p126 = por %p124, %p125
      %s127 = ssub.s32 %s25, %s44
      %s128 = ssub.s32 %s26, %s40
      %s129 = sor.u32 %s127, %s128
      %p130 = scmp.eq.s32.totalorder %s129, 0
      %s132 = sadd.s32 %s131, 1
      %s133 = scalar_select %p130, %s131, %s132
      %p136 = pneg %p130
      %p137 = scmp.eq.s32.totalorder %s18, 7
      %p138 = por %p136, %p137
      %p139 = scmp.ne.s32.totalorder %s131, %s134
      %p140 = scmp.eq.s32.totalorder %s18, 0
      %p141 = por %p139, %p140
      %p142 = scmp.ne.s32.totalorder %s131, %s134
      %p143 = scmp.eq.s32.totalorder %s23, 7
      %p144 = por %p142, %p143
      %p145 = scmp.ne.s32.totalorder %s134, %s135
      %p146 = scmp.eq.s32.totalorder %s23, 0
      %p147 = por %p145, %p146
      %p148 = scmp.ne.s32.totalorder %s134, %s135
      %p149 = scmp.eq.s32.totalorder %s24, 7
      %p150 = por %p148, %p149
      %p152 = scmp.ne.s32.totalorder %s135, %s151
      %p153 = scmp.eq.s32.totalorder %s24, 0
      %p154 = por %p152, %p153
      %p155 = scmp.le.s32.totalorder 1, %s18
      %p156 = scmp.lt.s32.totalorder %s18, 9
      %p157 = pnand %p155, %p156
      %p158 = pneg %p157
      // Predicated region
      $region9: #{tpu_custom_call.1} parent=5 // pred_check
        _
      $region10: #{tpu_custom_call.1} parent=5 // pred_check_branch
        %160 = sbr.rel (%p157) target = $region12
      $region11: #{tpu_custom_call.1} parent=5 // pred_region
        %s161 = ssub.s32 %s18, 1
      $region12: #{tpu_custom_call.1} parent=5 // pred_fallthru
        _
      %p162 = scmp.lt.s32.totalorder %s18, 8
      // Predicated region
      $region13: #{tpu_custom_call.1} parent=5 // pred_check
        %p163 = pneg %p162
      $region14: #{tpu_custom_call.1} parent=5 // pred_check_branch
        %165 = sbr.rel (%p163) target = $region16
      $region15: #{tpu_custom_call.1} parent=5 // pred_region
        // Predicated region
        $region17: #{tpu_custom_call.1} parent=15 // pred_check
          %p166 = pneg %p59
        $region18: #{tpu_custom_call.1} parent=15 // pred_check_branch
          %168 = sbr.rel (%p166) target = $region20
        $region19: #{tpu_custom_call.1} parent=15 // pred_region
          %s169 = sand.u32 %s49, 1
          %s170 = scalar_lea.sflag [#allocation4], %s169
          %s171 = sand.u32 %s49, 1
          %s172 = smul.addr %s171, 8
          %s173 = scalar_lea.vmem [#allocation3], %s172
          %s174 = smul.u32 2, %s25
          %176 = vsyncadd %s170, 0
          %s177 = smul.addr %s174, 2
          %s178 = sadd.s32 %s27, %s177
          %s179 = smul.addr %s178, 4
          %s180 = scalar_lea.hbm %s0, %s179
          %s181 = sshll.u32 %s180, 4
          %s182 = int_to_ptr.hbm [resolvable:$true] %s181
          %s183 = sshll.u32 %s173, 4
          %s184 = int_to_ptr.vmem [resolvable:$true] %s183
          %189 = dma.hbm_to_vmem [thread:$0]  %s182, 128, %s184, %s170, 128, 64, 4
        $region20: #{tpu_custom_call.1} parent=15 // pred_fallthru
          _
        // Predicated region
        $region21: #{tpu_custom_call.1} parent=15 // pred_check
          %p190 = pneg %p87
        $region22: #{tpu_custom_call.1} parent=15 // pred_check_branch
          %192 = sbr.rel (%p190) target = $region24
        $region23: #{tpu_custom_call.1} parent=15 // pred_region
          %s193 = sand.u32 %s18, 1
          %s194 = scalar_lea.sflag [#allocation7], %s193
          %s195 = sand.u32 %s77, 1
          %s196 = smul.addr %s195, 128
          %s197 = scalar_lea.vmem [#allocation6], %s196
          %s198 = smul.u32 16, %s27
          %s199 = smul.u32 2, %s26
          %201 = vsyncadd %s194, 0
          %s202 = smul.addr %s198, 4
          %s203 = sadd.s32 %s199, %s202
          %s204 = smul.addr %s203, 4
          %s205 = scalar_lea.hbm %s1, %s204
          %s206 = sshll.u32 %s205, 4
          %s207 = int_to_ptr.hbm [resolvable:$true] %s206
          %s208 = sshll.u32 %s197, 4
          %s209 = int_to_ptr.vmem [resolvable:$true] %s208
          %214 = dma.hbm_to_vmem [thread:$0]  %s207, 2048, %s209, %s194, 256, 128, 8
        $region24: #{tpu_custom_call.1} parent=15 // pred_fallthru
          _
        // Predicated region
        $region25: #{tpu_custom_call.1} parent=15 // pred_check
          %p215 = pneg %p113
        $region26: #{tpu_custom_call.1} parent=15 // pred_check_branch
          %217 = sbr.rel (%p215) target = $region28
        $region27: #{tpu_custom_call.1} parent=15 // pred_region
          %s218 = sand.u32 %s18, 1
          %s219 = scalar_lea.sflag [#allocation7], %s218
          %s220 = sand.u32 %s103, 1
          %s221 = smul.addr %s220, 2
          %s222 = scalar_lea.vmem [#allocation8], %s221
          %s223 = smul.u32 2, %s26
          %225 = vsyncadd %s219, 0
          %s226 = scalar_lea.hbm %s2, %s223
          %s228 = sshll.u32 %s226, 4
          %s229 = int_to_ptr.hbm [resolvable:$true] %s228
          %s230 = sshll.u32 %s222, 4
          %s231 = int_to_ptr.vmem [resolvable:$true] %s230
          %233 = dma.hbm_to_vmem [thread:$0]  %s229, 32, %s231, %s219
        $region28: #{tpu_custom_call.1} parent=15 // pred_fallthru
          _
      $region16: #{tpu_custom_call.1} parent=5 // pred_fallthru
        _
      %p234 = scmp.le.s32.totalorder 1, %s18
      %p235 = scmp.lt.s32.totalorder %s18, 9
      %p236 = pnand %p234, %p235
      %p237 = pneg %p236
      // Predicated region
      $region29: #{tpu_custom_call.1} parent=5 // pred_check
        _
      $region30: #{tpu_custom_call.1} parent=5 // pred_check_branch
        %239 = sbr.rel (%p236) target = $region32
      $region31: #{tpu_custom_call.1} parent=5 // pred_region
        %s240 = ssub.s32 %s18, 1
        %s241 = sand.u32 %s52, 1
        %s242 = scalar_lea.sflag [#allocation4], %s241
        %s243 = sand.u32 %s52, 1
        %s244 = smul.addr %s243, 8
        %s245 = scalar_lea.vmem [#allocation3], %s244
        // Predicated region
        $region33: #{tpu_custom_call.1} parent=31 // pred_check
          %p246 = pneg %p65
        $region34: #{tpu_custom_call.1} parent=31 // pred_check_branch
          %248 = sbr.rel (%p246) target = $region36
        $region35: #{tpu_custom_call.1} parent=31 // pred_region
          %250 = dma.done %s242, 128
        $region36: #{tpu_custom_call.1} parent=31 // pred_fallthru
          _
        %s251 = sand.u32 %s23, 1
        %s252 = scalar_lea.sflag [#allocation7], %s251
        %s253 = sand.u32 %s80, 1
        %s254 = smul.addr %s253, 128
        %s255 = scalar_lea.vmem [#allocation6], %s254
        // Predicated region
        $region37: #{tpu_custom_call.1} parent=31 // pred_check
          %p256 = pneg %p93
        $region38: #{tpu_custom_call.1} parent=31 // pred_check_branch
          %258 = sbr.rel (%p256) target = $region40
        $region39: #{tpu_custom_call.1} parent=31 // pred_region
          %260 = dma.done %s252, 2048
        $region40: #{tpu_custom_call.1} parent=31 // pred_fallthru
          _
        %s261 = sand.u32 %s23, 1
        %s262 = scalar_lea.sflag [#allocation7], %s261
        %s263 = sand.u32 %s106, 1
        %s264 = smul.addr %s263, 2
        %s265 = scalar_lea.vmem [#allocation8], %s264
        // Predicated region
        $region41: #{tpu_custom_call.1} parent=31 // pred_check
          %p266 = pneg %p119
        $region42: #{tpu_custom_call.1} parent=31 // pred_check_branch
          %268 = sbr.rel (%p266) target = $region44
        $region43: #{tpu_custom_call.1} parent=31 // pred_region
          %270 = dma.done %s262, 32
        $region44: #{tpu_custom_call.1} parent=31 // pred_fallthru
          _
        %s271 = sand.u32 %s52, 1
        %s272 = scalar_lea.sflag [#allocation4], %s271
        %s273 = sand.u32 %s52, 1
        %s274 = smul.addr %s273, 8
        %s275 = scalar_lea.vmem [#allocation3], %s274
        %p276 = pneg %p65
        %p277 = pneg %p62
        %s278 = sand.u32 %s23, 1
        %s279 = scalar_lea.sflag [#allocation7], %s278
        %s280 = sand.u32 %s80, 1
        %s281 = smul.addr %s280, 128
        %s282 = scalar_lea.vmem [#allocation6], %s281
        %p283 = pneg %p93
        %p284 = pneg %p90
        %s285 = sand.u32 %s23, 1
        %s286 = scalar_lea.sflag [#allocation7], %s285
        %s287 = sand.u32 %s106, 1
        %s288 = smul.addr %s287, 2
        %s289 = scalar_lea.vmem [#allocation8], %s288
        %p290 = pneg %p119
        %p291 = pneg %p116
        %p292 = pneg %p147
        %p293 = pneg %p144
        %s294 = sand.u32 %s134, 1
        %s295 = scalar_lea.sflag [#allocation5], %s294
        %s296 = sand.u32 %s134, 1
        %s297 = smul.addr %s296, 16
        %s298 = scalar_lea.vmem [#allocation9], %s297
        %s299 = smul.u32 2, %s28
        %s300 = smul.u32 16, %s30
        %s301 = smul.u32 2, %s29
        %s302 = smul.u32 2, %s29
        %s303 = smul.u32 2, %s28
        %p304 = scmp.eq.s32.totalorder %s30, 0
        // Predicated region
        $region45: #{tpu_custom_call.1} parent=31 // pred_check
          %p305 = pneg %p304
        $region46: #{tpu_custom_call.1} parent=31 // pred_check_branch
          %307 = sbr.rel (%p305) target = $region48
        $region47: #{tpu_custom_call.1} parent=31 // pred_region
          %308 = vst [vmem:[#allocation2] sm:$0xff] 0.0
          %309 = vst [vmem:[#allocation2 + $0x8] sm:$0xff] 0.0
          %310 = vst [vmem:[#allocation2 + $0x10] sm:$0xff] 0.0
          %311 = vst [vmem:[#allocation2 + $0x18] sm:$0xff] 0.0
        $region48: #{tpu_custom_call.1} parent=31 // pred_fallthru
          _
        %v312 = vld [vmem:[#allocation2] sm:$0xff]
        %v313 = vld [vmem:[#allocation2 + $0x8] sm:$0xff]
        %v314 = vld [vmem:[#allocation2 + $0x10] sm:$0xff]
        %v315 = vld [vmem:[#allocation2 + $0x18] sm:$0xff]
        %v316 = vld [vmem:[%s245] sm:$0xf]
        %v317 = vld [vmem:[%s245 + $0x4] sm:$0xf]
        %v318 = vld [vmem:[%s255] sm:$0xff]
        %v319 = vld [vmem:[%s255 + $0x8] sm:$0xff]
        %v320 = vld [vmem:[%s255 + $0x10] sm:$0xff]
        %v321 = vld [vmem:[%s255 + $0x18] sm:$0xff]
        %v322 = vld [vmem:[%s255 + $0x20] sm:$0xff]
        %v323 = vld [vmem:[%s255 + $0x28] sm:$0xff]
        %v324 = vld [vmem:[%s255 + $0x30] sm:$0xff]
        %v325 = vld [vmem:[%s255 + $0x38] sm:$0xff]
        %v326 = vld [vmem:[%s255 + $0x40] sm:$0xff]
        %v327 = vld [vmem:[%s255 + $0x48] sm:$0xff]
        %v328 = vld [vmem:[%s255 + $0x50] sm:$0xff]
        %v329 = vld [vmem:[%s255 + $0x58] sm:$0xff]
        %v330 = vld [vmem:[%s255 + $0x60] sm:$0xff]
        %v331 = vld [vmem:[%s255 + $0x68] sm:$0xff]
        %v332 = vld [vmem:[%s255 + $0x70] sm:$0xff]
        %v333 = vld [vmem:[%s255 + $0x78] sm:$0xff]
        %v336 = vunpack.c.l.b16 %v316
        %v337 = vunpack.c.l.b16 %v317
        %v338 = vpack.c.b16 %v337, %v336
        %v356 = vunpack.c.l.b16 %v318
        %v357 = vunpack.c.h.b16 %v318
        %v358 = vunpack.c.l.b16 %v319
        %v359 = vunpack.c.h.b16 %v319
        %v360 = vunpack.c.l.b16 %v320
        %v361 = vunpack.c.h.b16 %v320
        %v362 = vunpack.c.l.b16 %v321
        %v363 = vunpack.c.h.b16 %v321
        %v364 = vunpack.c.l.b16 %v322
        %v365 = vunpack.c.h.b16 %v322
        %v366 = vunpack.c.l.b16 %v323
        %v367 = vunpack.c.h.b16 %v323
        %v368 = vunpack.c.l.b16 %v324
        %v369 = vunpack.c.h.b16 %v324
        %v370 = vunpack.c.l.b16 %v325
        %v371 = vunpack.c.h.b16 %v325
        %v372 = vunpack.c.l.b16 %v326
        %v373 = vunpack.c.h.b16 %v326
        %v374 = vunpack.c.l.b16 %v327
        %v375 = vunpack.c.h.b16 %v327
        %v376 = vunpack.c.l.b16 %v328
        %v377 = vunpack.c.h.b16 %v328
        %v378 = vunpack.c.l.b16 %v329
        %v379 = vunpack.c.h.b16 %v329
        %v380 = vunpack.c.l.b16 %v330
        %v381 = vunpack.c.h.b16 %v330
        %v382 = vunpack.c.l.b16 %v331
        %v383 = vunpack.c.h.b16 %v331
        %v384 = vunpack.c.l.b16 %v332
        %v385 = vunpack.c.h.b16 %v332
        %v386 = vunpack.c.l.b16 %v333
        %v387 = vunpack.c.h.b16 %v333
        %v388 = vpack.c.b16 %v358, %v356
        %v389 = vpack.c.b16 %v359, %v357
        %v390 = vpack.c.b16 %v362, %v360
        %v391 = vpack.c.b16 %v363, %v361
        %v392 = vpack.c.b16 %v366, %v364
        %v393 = vpack.c.b16 %v367, %v365
        %v394 = vpack.c.b16 %v370, %v368
        %v395 = vpack.c.b16 %v371, %v369
        %v396 = vpack.c.b16 %v374, %v372
        %v397 = vpack.c.b16 %v375, %v373
        %v398 = vpack.c.b16 %v378, %v376
        %v399 = vpack.c.b16 %v379, %v377
        %v400 = vpack.c.b16 %v382, %v380
        %v401 = vpack.c.b16 %v383, %v381
        %v402 = vpack.c.b16 %v386, %v384
        %v403 = vpack.c.b16 %v387, %v385
        %420 = vmatpush.bf16.msra.mxu0 %v402
        %421 = vmatpush.bf16.msra.mxu0 %v400
        %422 = vmatpush.bf16.msra.mxu0 %v398
        %423 = vmatpush.bf16.msra.mxu0 %v396
        %424 = vmatpush.bf16.msra.mxu0 %v394
        %425 = vmatpush.bf16.msra.mxu0 %v392
        %426 = vmatpush.bf16.msra.mxu0 %v390
        %427 = vmatpush.bf16.msra.mxu0 %v388
        %428 = vmatmul.bf16.gmra.mxu0 %v338
        %v429 = vpop.f32.mrf.mxu0
        %v430 = vadd.f32 0.0, %v429
        %v431 = vpop.f32.mrf.mxu0
        %v432 = vadd.f32 0.0, %v431
        %433 = vdwg.mxu0
        %434 = vmatpush.bf16.msra.mxu0 %v403
        %435 = vmatpush.bf16.msra.mxu0 %v401
        %436 = vmatpush.bf16.msra.mxu0 %v399
        %437 = vmatpush.bf16.msra.mxu0 %v397
        %438 = vmatpush.bf16.msra.mxu0 %v395
        %439 = vmatpush.bf16.msra.mxu0 %v393
        %440 = vmatpush.bf16.msra.mxu0 %v391
        %441 = vmatpush.bf16.msra.mxu0 %v389
        %442 = vmatmul.bf16.gmra.mxu0 %v338
        %v443 = vpop.f32.mrf.mxu0
        %v444 = vadd.f32 0.0, %v443
        %v445 = vpop.f32.mrf.mxu0
        %v446 = vadd.f32 0.0, %v445
        %447 = vdwg.mxu0
        %v448 = vadd.f32 %v312, %v430
        %v449 = vadd.f32 %v313, %v444
        %v450 = vadd.f32 %v314, %v432
        %v451 = vadd.f32 %v315, %v446
        %452 = vst [vmem:[#allocation2] sm:$0xff] %v448
        %453 = vst [vmem:[#allocation2 + $0x8] sm:$0xff] %v449
        %454 = vst [vmem:[#allocation2 + $0x10] sm:$0xff] %v450
        %455 = vst [vmem:[#allocation2 + $0x18] sm:$0xff] %v451
        %p456 = scmp.eq.s32.totalorder %s30, 1
        // Predicated region
        $region49: #{tpu_custom_call.1} parent=31 // pred_check
          %p457 = pneg %p456
        $region50: #{tpu_custom_call.1} parent=31 // pred_check_branch
          %459 = sbr.rel (%p457) target = $region52
        $region51: #{tpu_custom_call.1} parent=31 // pred_region
          %v460 = vld [vmem:[#allocation2] sm:$0xff]
          %v461 = vld [vmem:[#allocation2 + $0x8] sm:$0xff]
          %v462 = vld [vmem:[#allocation2 + $0x10] sm:$0xff]
          %v463 = vld [vmem:[#allocation2 + $0x18] sm:$0xff]
          %v464 = vld [vmem:[%s265] sm:$0x3]
          %v466 = vperm.slane %v464, 0
          %v467 = vperm.slane %v464, 1
          %v470 = vadd.f32 %v460, %v466
          %v471 = vadd.f32 %v461, %v467
          %v472 = vadd.f32 %v462, %v466
          %v473 = vadd.f32 %v463, %v467
          %v474 = vxor.u32 %v471, 2147483648
          %v475 = vxor.u32 %v473, 2147483648
          %v476 = vmul.f32 %v474, 1.442695
          %v477 = vpow.pop %v476
          %v478 = vmul.f32 %v475, 1.442695
          %v479 = vpow.pop %v478
          %v480 = vadd.f32 %v477, 1.0
          %v481 = vadd.f32 %v479, 1.0
          %v482 = vrcp.pop %v480
          %v483 = vmul.f32 %v480, %v482
          %v484 = vsub.f32 1.0, %v483
          %v485 = vmul.f32 %v482, %v484
          %v486 = vadd.f32 %v482, %v485
          %vm487 = vweird.f32 %v480
          %vm488 = vweird.f32 %v482
          %vm489 = vmor %vm487, %vm488
          %v490 = vsel %vm489, %v482, %v486
          %v491 = vand.u32 2147483647, %v480
          %vm492 = vcmp.eq.f32.partialorder %v491, 8.507059e+37
          %v493 = vand.u32 %v480, 2147483648
          %v494 = vor.u32 1.1754944e-38, %v493
          %v495 = vsel %vm492, %v494, %v490
          %v496 = vmul.f32 1.0, %v495
          %v497 = vrcp.pop %v481
          %v498 = vmul.f32 %v481, %v497
          %v499 = vsub.f32 1.0, %v498
          %v500 = vmul.f32 %v497, %v499
          %v501 = vadd.f32 %v497, %v500
          %vm502 = vweird.f32 %v481
          %vm503 = vweird.f32 %v497
          %vm504 = vmor %vm502, %vm503
          %v505 = vsel %vm504, %v497, %v501
          %v506 = vand.u32 2147483647, %v481
          %vm507 = vcmp.eq.f32.partialorder %v506, 8.507059e+37
          %v508 = vand.u32 %v481, 2147483648
          %v509 = vor.u32 1.1754944e-38, %v508
          %v510 = vsel %vm507, %v509, %v505
          %v511 = vmul.f32 1.0, %v510
          %v512 = vmul.f32 %v470, %v496
          %v513 = vmul.f32 %v472, %v511
          %514 = vst [vmem:[%s298] sm:$0xff] %v512
          %515 = vst [vmem:[%s298 + $0x8] sm:$0xff] %v513
        $region52: #{tpu_custom_call.1} parent=31 // pred_fallthru
          _
        %s516 = sand.u32 %s134, 1
        %s517 = scalar_lea.sflag [#allocation5], %s516
        %s518 = sand.u32 %s134, 1
        %s519 = smul.addr %s518, 16
        %s520 = scalar_lea.vmem [#allocation9], %s519
        // Predicated region
        $region53: #{tpu_custom_call.1} parent=31 // pred_check
          %p521 = pneg %p144
        $region54: #{tpu_custom_call.1} parent=31 // pred_check_branch
          %523 = sbr.rel (%p521) target = $region56
        $region55: #{tpu_custom_call.1} parent=31 // pred_region
          %s524 = smul.u32 2, %s28
          %526 = vsyncadd %s517, 0
          %s527 = smul.addr %s524, 2
          %s528 = sadd.s32 %s29, %s527
          %s529 = smul.addr %s528, 8
          %s530 = scalar_lea.hbm %s3, %s529
          %s531 = sshll.u32 %s520, 4
          %s532 = int_to_ptr.vmem [resolvable:$true] %s531
          %s533 = sshll.u32 %s530, 4
          %s534 = int_to_ptr.hbm [resolvable:$true] %s533
          %539 = dma.vmem_to_hbm [thread:$0]  %s532, 256, %s534, %s517, 128, 256, 8
        $region56: #{tpu_custom_call.1} parent=31 // pred_fallthru
          _
      $region32: #{tpu_custom_call.1} parent=5 // pred_fallthru
        _
      %p540 = scmp.le.s32.totalorder 2, %s18
      // Predicated region
      $region57: #{tpu_custom_call.1} parent=5 // pred_check
        %p541 = pneg %p540
      $region58: #{tpu_custom_call.1} parent=5 // pred_check_branch
        %543 = sbr.rel (%p541) target = $region60
      $region59: #{tpu_custom_call.1} parent=5 // pred_region
        %s544 = ssub.s32 %s18, 2
        // Predicated region
        $region61: #{tpu_custom_call.1} parent=59 // pred_check
          %p545 = pneg %p150
        $region62: #{tpu_custom_call.1} parent=59 // pred_check_branch
          %547 = sbr.rel (%p545) target = $region64
        $region63: #{tpu_custom_call.1} parent=59 // pred_region
          %s548 = sand.u32 %s135, 1
          %s549 = scalar_lea.sflag [#allocation5], %s548
          %s550 = sand.u32 %s135, 1
          %s551 = smul.addr %s550, 16
          %s552 = scalar_lea.vmem [#allocation9], %s551
          %554 = dma.done %s549, 256
        $region64: #{tpu_custom_call.1} parent=59 // pred_fallthru
          _
      $region60: #{tpu_custom_call.1} parent=5 // pred_fallthru
        _
    $region6: #{tpu_custom_call.1} parent=1 // loop_footer
      %s22 = sadd.s32 1, %s18
    $region7: #{tpu_custom_call.1} parent=1 // loop_footer_branch
      %17 = sbr.rel target = $region3
    $region8: #{tpu_custom_call.1} parent=1 // loop_exit
      _
    %555 = vsyncpa [#allocation4], 1
    %s556 = scalar_lea.sflag [#allocation4], 1
    %557 = vsyncpa %s556, 1
    %558 = vsyncpa [#allocation7], 1
    %s559 = scalar_lea.sflag [#allocation7], 1
    %560 = vsyncpa %s559, 1
    %561 = vsyncpa [#allocation5], 1
    %s562 = scalar_lea.sflag [#allocation5], 1
    %563 = vsyncpa %s562, 1

</llo_original>
